<compile_context>
chip_gen: v7x
topology: tpu7x:2x2x1
jax: 0.10.0
libtpu: 0.0.40
codegen_flags: <defaults>
</compile_context>

<pallas_src>
import functools

import numpy as np
import jax
import jax.numpy as jnp
from jax.experimental import pallas as pl
from jax.experimental.pallas import tpu as pltpu


# ---------------------------------------------------------------------------
# Upsample (separable bilinear, align_corners=True) + concat + pad
# ---------------------------------------------------------------------------

def _interp_matrix(n_in, n_out):
    """Interpolation matrix for bilinear upsampling with align_corners=True."""
    A = np.zeros((n_out, n_in), np.float32)
    if n_in == 1 or n_out == 1:
        A[:, 0] = 1.0
        return A
    scale = (n_in - 1) / (n_out - 1)
    for o in range(n_out):
        s = o * scale
        lo = int(np.floor(s))
        hi = min(lo + 1, n_in - 1)
        w = s - lo
        A[o, lo] += 1.0 - w
        A[o, hi] += w
    return A


def _upsample_h_kernel(ah_ref, x_ref, o_ref):
    """H-direction upsample: one 2-D MXU matmul, lanes = W*C (lane dense).

    ah_ref: (Ho, H)        x_ref: (1, H, W*C)       o_ref: (1, Ho, W*C)
    """
    o_ref[0] = jnp.dot(
        ah_ref[...], x_ref[0], preferred_element_type=jnp.float32
    ).astype(o_ref.dtype)


def _upsample_w_concat_pad_kernel(*refs, has_skip):
    """W-direction upsample + channel-concat skip + zero halo (padding=1).

    awt_ref : (W, Wo)   -- Aw transposed
    t_ref   : (1, Ho, W, C)   H-upsampled activations
    skip_ref: (1, Ho, Wo, Cs) (only if has_skip)
    o_ref   : (1, Ho+2, Wo+2, C[+Cs])  zero-padded conv1 input (bf16)
    """
    if has_skip:
        awt_ref, t_ref, skip_ref, o_ref = refs
    else:
        awt_ref, t_ref, o_ref = refs
        skip_ref = None

    _, Ho, W, C = t_ref.shape
    Wo = awt_ref.shape[1]

    # Move W to the minor axis, fold (Ho, C) onto rows, single 2-D matmul.
    t = jnp.swapaxes(t_ref[0], 1, 2).reshape(Ho * C, W)            # (Ho*C, W)
    u = jnp.dot(t, awt_ref[...], preferred_element_type=jnp.float32)  # (Ho*C, Wo)
    up = jnp.swapaxes(u.reshape(Ho, C, Wo), 1, 2)                  # (Ho, Wo, C)

    if skip_ref is not None:
        up = jnp.concatenate([up, skip_ref[0]], axis=-1)           # (Ho, Wo, Ct)

    # Write zero halo + interior: conv1 reads this directly (no wrapper pad).
    o_ref[0] = jnp.zeros(o_ref.shape[1:], o_ref.dtype)
    o_ref[0, 1:Ho + 1, 1:Wo + 1, :] = up.astype(o_ref.dtype)


def upsample_concat_pad(x, skip, out_dtype=jnp.bfloat16):
    """x: (N, H, W, C) f32 NHWC; skip: (N, 2H, 2W, Cs) f32 or None.

    Returns the zero-padded conv1 input (N, 2H+2, 2W+2, C+Cs) in `out_dtype`.
    """
    N, H, W, C = x.shape
    Ho, Wo = 2 * H, 2 * W
    Ah = jnp.asarray(_interp_matrix(H, Ho))          # (Ho, H)
    AwT = jnp.asarray(_interp_matrix(W, Wo).T)       # (W, Wo)

    # Pass 1: H-direction (lane-dense W*C layout; free HBM reshape outside).
    xf = x.reshape(N, H, W * C)
    th = pl.pallas_call(
        _upsample_h_kernel,
        grid=(N,),
        in_specs=[
            pl.BlockSpec((Ho, H), lambda n: (0, 0)),
            pl.BlockSpec((1, H, W * C), lambda n: (n, 0, 0)),
        ],
        out_specs=pl.BlockSpec((1, Ho, W * C), lambda n: (n, 0, 0)),
        out_shape=jax.ShapeDtypeStruct((N, Ho, W * C), jnp.float32),
        compiler_params=pltpu.CompilerParams(dimension_semantics=("parallel",)),
    )(Ah, xf)
    th = th.reshape(N, Ho, W, C)   # metadata-only reshape in HBM

    # Pass 2: W-direction + skip concat + zero-pad halo.
    Cs = 0 if skip is None else skip.shape[-1]
    Ct = C + Cs
    kernel = functools.partial(_upsample_w_concat_pad_kernel,
                               has_skip=skip is not None)
    in_specs = [
        pl.BlockSpec((W, Wo), lambda n: (0, 0)),
        pl.BlockSpec((1, Ho, W, C), lambda n: (n, 0, 0, 0)),
    ]
    args = [AwT, th]
    if skip is not None:
        in_specs.append(pl.BlockSpec((1, Ho, Wo, Cs), lambda n: (n, 0, 0, 0)))
        args.append(skip)

    return pl.pallas_call(
        kernel,
        grid=(N,),
        in_specs=in_specs,
        out_specs=pl.BlockSpec((1, Ho + 2, Wo + 2, Ct), lambda n: (n, 0, 0, 0)),
        out_shape=jax.ShapeDtypeStruct((N, Ho + 2, Wo + 2, Ct), out_dtype),
        compiler_params=pltpu.CompilerParams(dimension_semantics=("parallel",)),
    )(*args)


# ---------------------------------------------------------------------------
# conv3x3 (pad=1, no bias) -> ReLU -> BatchNorm2d, two-pass + row tiling
# ---------------------------------------------------------------------------

def _pick_row_tile(H, W, target_rows=512):
    """Largest divisor TH of H with TH*W <= target_rows (bounded VMEM tile)."""
    best = 1
    for cand in range(1, H + 1):
        if H % cand == 0 and cand * W <= target_rows:
            best = cand
    return best


def _conv_relu_stats_kernel(xpad_hbm, w_ref, y_ref, stats_ref, xbuf, dma_sem):
    """Pass 1: conv3x3 (single im2col matmul) + ReLU + per-block BN stats.

    xpad_hbm : (N, H+2, W+2, Cin) bf16 in HBM (memory_space=pl.ANY)
    w_ref    : (9*Cin, Cout) bf16       -- resident weight block
    y_ref    : (1, TH, W, Cout) bf16    -- pre-BN activations (row block)
    stats_ref: (1, 1, 2, Cout) f32      -- [sum, sum_of_squares] for this block
    xbuf     : VMEM (TH+2, W+2, Cin) bf16 scratch (manual halo DMA)
    """
    _, TH, W, Cout = y_ref.shape
    Cin = xbuf.shape[2]
    n = pl.program_id(0)
    j = pl.program_id(1)

    # DMA only this row-block's halo window from HBM.
    cp = pltpu.make_async_copy(
        xpad_hbm.at[n, pl.ds(j * TH, TH + 2)], xbuf, dma_sem)
    cp.start()
    cp.wait()

    xb = xbuf[...].astype(jnp.float32)                       # (TH+2, W+2, Cin)

    # im2col: channel order [dy, dx, cin] matches w.reshape(9*Cin, Cout).
    cols = jnp.concatenate(
        [xb[:, dx:dx + W, :] for dx in range(3)], axis=-1)   # (TH+2, W, 3Cin)
    patches = jnp.concatenate(
        [cols[dy:dy + TH] for dy in range(3)], axis=-1)      # (TH, W, 9Cin)

    acc = jnp.dot(
        patches.reshape(TH * W, 9 * Cin).astype(jnp.bfloat16),
        w_ref[...],
        preferred_element_type=jnp.float32)                  # (TH*W, Cout) f32

    y = jnp.maximum(acc, 0.0)                                # ReLU before BN

    # Single-pass partial BatchNorm statistics (sum, sum of squares).
    stats_ref[0, 0] = jnp.concatenate(
        [jnp.sum(y, axis=0, keepdims=True),
         jnp.sum(y * y, axis=0, keepdims=True)], axis=0)     # (2, Cout)

    y_ref[0] = y.reshape(TH, W, Cout).astype(y_ref.dtype)


def _bn_apply_kernel(y_ref, scale_ref, shift_ref, o_ref, *, pad_output):
    """Pass 2: y * scale + shift (gamma*rsqrt(var) folded into `scale`).

    Optionally writes a zero-padded output so the next conv needs no wrapper pad.
    """
    _, H, W, _ = y_ref.shape
    z = y_ref[0].astype(jnp.float32) * scale_ref[...] + shift_ref[...]
    if pad_output:
        o_ref[0] = jnp.zeros(o_ref.shape[1:], o_ref.dtype)
        o_ref[0, 1:H + 1, 1:W + 1, :] = z.astype(o_ref.dtype)
    else:
        o_ref[0] = z.astype(o_ref.dtype)


def conv3x3_relu_bn(xpad, w_hwio, gamma, beta, *, eps=1e-5,
                    pad_output=False, out_dtype=jnp.float32):
    """xpad: (N, H+2, W+2, Cin) bf16 (zero halo); w_hwio: (3,3,Cin,Cout) f32."""
    N, Hp, Wp, Cin = xpad.shape
    H, W = Hp - 2, Wp - 2
    Cout = w_hwio.shape[-1]
    w9 = w_hwio.reshape(9 * Cin, Cout).astype(jnp.bfloat16)

    TH = _pick_row_tile(H, W)
    nrb = H // TH

    y, stats = pl.pallas_call(
        _conv_relu_stats_kernel,
        grid=(N, nrb),
        in_specs=[
            pl.BlockSpec(memory_space=pl.ANY),                  # xpad stays in HBM
            pl.BlockSpec((9 * Cin, Cout), lambda n, j: (0, 0)),  # resident weights
        ],
        out_specs=(
            pl.BlockSpec((1, TH, W, Cout), lambda n, j: (n, j, 0, 0)),
            pl.BlockSpec((1, 1, 2, Cout), lambda n, j: (n, j, 0, 0)),
        ),
        out_shape=(
            jax.ShapeDtypeStruct((N, H, W, Cout), jnp.bfloat16),
            jax.ShapeDtypeStruct((N, nrb, 2, Cout), jnp.float32),
        ),
        scratch_shapes=[
            pltpu.VMEM((TH + 2, Wp, Cin), xpad.dtype),
            pltpu.SemaphoreType.DMA,
        ],
        compiler_params=pltpu.CompilerParams(
            dimension_semantics=("parallel", "parallel"),
            vmem_limit_bytes=48 * 1024 * 1024,
        ),
        cost_estimate=pl.CostEstimate(
            flops=2 * N * H * W * 9 * Cin * Cout,
            transcendentals=0,
            bytes_accessed=(xpad.size * xpad.dtype.itemsize
                            + w9.size * 2
                            + N * H * W * Cout * 2
                            + N * nrb * 2 * Cout * 4),
        ),
    )(xpad, w9)

    # Tiny global reduction of per-block stats (plain JAX glue).
    s = jnp.sum(stats, axis=(0, 1))                 # (2, Cout)
    cnt = float(N * H * W)
    mean = s[0] / cnt
    var = jnp.maximum(s[1] / cnt - mean * mean, 0.0)   # biased variance
    inv = jax.lax.rsqrt(var + eps)
    scale = (gamma * inv).astype(jnp.float32).reshape(1, Cout)
    shift = (beta - mean * gamma * inv).astype(jnp.float32).reshape(1, Cout)

    if pad_output:
        out_shape = jax.ShapeDtypeStruct((N, H + 2, W + 2, Cout), out_dtype)
        out_spec = pl.BlockSpec((1, H + 2, W + 2, Cout), lambda n: (n, 0, 0, 0))
    else:
        out_shape = jax.ShapeDtypeStruct((N, H, W, Cout), out_dtype)
        out_spec = pl.BlockSpec((1, H, W, Cout), lambda n: (n, 0, 0, 0))

    return pl.pallas_call(
        functools.partial(_bn_apply_kernel, pad_output=pad_output),
        grid=(N,),
        in_specs=[
            pl.BlockSpec((1, H, W, Cout), lambda n: (n, 0, 0, 0)),
            pl.BlockSpec((1, Cout), lambda n: (0, 0)),
            pl.BlockSpec((1, Cout), lambda n: (0, 0)),
        ],
        out_specs=out_spec,
        out_shape=out_shape,
        compiler_params=pltpu.CompilerParams(dimension_semantics=("parallel",)),
    )(y, scale, shift)


# ---------------------------------------------------------------------------
# DecoderBlock
# ---------------------------------------------------------------------------

class DecoderBlockPallas:
    """Pallas implementation of DecoderBlock (in/out in PyTorch NCHW layout)."""

    def __init__(self, in_channels, out_channels, skip_channels=0,
                 key=jax.random.PRNGKey(0)):
        keys = jax.random.split(key, 6)
        c1_in = in_channels + skip_channels

        def conv_init(k, cin, cout):
            fan_in = cin * 9
            return (jax.random.normal(k, (3, 3, cin, cout), jnp.float32)
                    * np.sqrt(2.0 / fan_in))

        self.w1 = conv_init(keys[0], c1_in, out_channels)       # HWIO
        self.w2 = conv_init(keys[1], out_channels, out_channels)
        self.g1 = 1.0 + 0.1 * jax.random.normal(keys[2], (out_channels,), jnp.float32)
        self.b1 = 0.1 * jax.random.normal(keys[3], (out_channels,), jnp.float32)
        self.g2 = 1.0 + 0.1 * jax.random.normal(keys[4], (out_channels,), jnp.float32)
        self.b2 = 0.1 * jax.random.normal(keys[5], (out_channels,), jnp.float32)

    def __call__(self, x_nchw, skip_nchw=None):
        # NCHW -> NHWC at the boundary (glue).
        x = jnp.transpose(x_nchw, (0, 2, 3, 1)).astype(jnp.float32)
        skip = None
        if skip_nchw is not None:
            skip = jnp.transpose(skip_nchw, (0, 2, 3, 1)).astype(jnp.float32)

        # Upsample x2 + concat skip + zero halo, written once (bf16).
        xc_pad = upsample_concat_pad(x, skip)

        # conv1 -> ReLU -> BN, normalize pass writes padded bf16 for conv2.
        h1 = conv3x3_relu_bn(xc_pad, self.w1, self.g1, self.b1,
                             pad_output=True, out_dtype=jnp.bfloat16)
        # conv2 -> ReLU -> BN, final f32 output.
        out = conv3x3_relu_bn(h1, self.w2, self.g2, self.b2,
                              pad_output=False, out_dtype=jnp.float32)
        return jnp.transpose(out, (0, 3, 1, 2))                 # back to NCHW


# ---------------------------------------------------------------------------
# Pure-JAX reference (for a loose sanity check; bf16 MXU path in the kernels)
# ---------------------------------------------------------------------------

def _reference_forward(x_nchw, skip_nchw, blk, eps=1e-5):
    x = jnp.transpose(x_nchw, (0, 2, 3, 1)).astype(jnp.float32)
    N, H, W, C = x.shape
    Ah = jnp.asarray(_interp_matrix(H, 2 * H))
    Aw = jnp.asarray(_interp_matrix(W, 2 * W))
    z = jnp.einsum('oh,nhwc->nowc', Ah, x)
    z = jnp.einsum('pw,nowc->nopc', Aw, z)
    if skip_nchw is not None:
        z = jnp.concatenate(
            [z, jnp.transpose(skip_nchw, (0, 2, 3, 1)).astype(jnp.float32)], axis=-1)

    def conv_relu_bn(z, w, g, b):
        y = jax.lax.conv_general_dilated(
            z, w, (1, 1), 'SAME', dimension_numbers=('NHWC', 'HWIO', 'NHWC'))
        y = jnp.maximum(y, 0.0)
        m = jnp.mean(y, axis=(0, 1, 2))
        v = jnp.mean(jnp.square(y - m), axis=(0, 1, 2))
        return (y - m) * jax.lax.rsqrt(v + eps) * g + b

    z = conv_relu_bn(z, blk.w1, blk.g1, blk.b1)
    z = conv_relu_bn(z, blk.w2, blk.g2, blk.b2)
    return jnp.transpose(z, (0, 3, 1, 2))


# ---------------------------------------------------------------------------
# Demo
# ---------------------------------------------------------------------------

if __name__ == "__main__":
    key = jax.random.PRNGKey(0)
    kx, ks, kp = jax.random.split(key, 3)

    N, Cin, H, W = 2, 32, 16, 16          # input (pre-upsample), NCHW
    Cskip, Cout = 16, 32                  # skip connection at 2x resolution

    x = jax.random.normal(kx, (N, Cin, H, W), jnp.float32)
    skip = jax.random.normal(ks, (N, Cskip, 2 * H, 2 * W), jnp.float32)

    block = DecoderBlockPallas(Cin, Cout, skip_channels=Cskip, key=kp)
    y = jax.block_until_ready(block(x, skip))

    assert y.shape == (N, Cout, 2 * H, 2 * W), y.shape
    assert bool(jnp.all(jnp.isfinite(y)))

    # Loose numerical sanity check vs. pure-JAX f32 reference (kernels use bf16
    # activations/weights on the MXU, so allow a generous tolerance).
    y_ref = jax.block_until_ready(_reference_forward(x, skip, block))
    err = float(jnp.max(jnp.abs(y - y_ref)))
    assert err < 0.5, f"max abs err vs reference: {err}"

    print("KERNEL_OK")
</pallas_src>

<mosaic_0001>
module attributes {stable_mosaic.version = 11 : i64} {
  func.func @_upsample_h_kernel(%arg0: i32, %arg1: memref<32x16xf32, #tpu.memory_space<vmem>>, %arg2: memref<1x16x512xf32, #tpu.memory_space<vmem>>, %arg3: memref<1x32x512xf32, #tpu.memory_space<vmem>>) attributes {dimension_semantics = [#tpu.dimension_semantics<parallel>], iteration_bounds = array<i64: 2>, scalar_prefetch = 0 : i64, scratch_operands = 0 : i64, tpu.core_type = #tpu.core_type<tc>, window_params = [{pipeline_mode = #tpu.pipeline_mode<synchronous>, transform_indices = @transform_0, window_bounds = array<i64: 32, 16>}, {transform_indices = @transform_1, window_bounds = array<i64: 1, 16, 512>}, {transform_indices = @transform_2, window_bounds = array<i64: 1, 32, 512>}]} {
    %c0 = arith.constant 0 : index
    %c0_0 = arith.constant 0 : index
    %0 = vector.load %arg1[%c0, %c0_0] : memref<32x16xf32, #tpu.memory_space<vmem>>, vector<32x16xf32>
    %c0_1 = arith.constant 0 : index
    %c0_2 = arith.constant 0 : index
    %c0_3 = arith.constant 0 : index
    %1 = vector.load %arg2[%c0_1, %c0_2, %c0_3] : memref<1x16x512xf32, #tpu.memory_space<vmem>>, vector<1x16x512xf32>
    %2 = vector.shape_cast %1 : vector<1x16x512xf32> to vector<16x512xf32>
    %cst = arith.constant dense<0.000000e+00> : vector<32x512xf32>
    %3 = tpu.matmul %0, %2, %cst {dimension_numbers = #tpu.dot_dimension_numbers<[1], [0], [0], [1], [0, 0, 1, 1], [], []>} : vector<32x16xf32>, vector<16x512xf32>, vector<32x512xf32> -> vector<32x512xf32>
    %c0_4 = arith.constant 0 : index
    %c0_5 = arith.constant 0 : index
    %c0_6 = arith.constant 0 : index
    %4 = vector.load %arg3[%c0_4, %c0_5, %c0_6] : memref<1x32x512xf32, #tpu.memory_space<vmem>>, vector<1x32x512xf32>
    %5 = vector.shape_cast %4 : vector<1x32x512xf32> to vector<32x512xf32>
    %6 = vector.shape_cast %3 : vector<32x512xf32> to vector<1x32x512xf32>
    tpu.vector_store %arg3[%c0_4, %c0_5, %c0_6], %6 {strides = array<i32>} : memref<1x32x512xf32, #tpu.memory_space<vmem>>, vector<1x32x512xf32>,
    return
  }
  func.func @transform_0(%arg0: i32) -> (i32, i32) {
    %c0_i32 = arith.constant 0 : i32
    %c0_i32_0 = arith.constant 0 : i32
    %c0_i32_1 = arith.constant 0 : i32
    return %c0_i32, %c0_i32_0 : i32, i32
  }
  func.func @transform_1(%arg0: i32) -> (i32, i32, i32) {
    %c0_i32 = arith.constant 0 : i32
    %c0_i32_0 = arith.constant 0 : i32
    %c0_i32_1 = arith.constant 0 : i32
    return %arg0, %c0_i32, %c0_i32_0 : i32, i32, i32
  }
  func.func @transform_2(%arg0: i32) -> (i32, i32, i32) {
    %c0_i32 = arith.constant 0 : i32
    %c0_i32_0 = arith.constant 0 : i32
    %c0_i32_1 = arith.constant 0 : i32
    return %arg0, %c0_i32, %c0_i32_0 : i32, i32, i32
  }
}

</mosaic_0001>

<llo_original>
// kernel: tpu_custom_call.1
$region0: #{tpu_custom_call.1}
  #allocation0 [shape = 'u32[]', space=smem, size = 0x4, offset = 0x4, fixed_abs, tag = 'smem constant byte address 0x4 - core index']
  #allocation1 [shape = 'u32[144,128]{1,0:T(1,128)}', space=vmem, size = 0x12000, scoped, tag = 'internal scratch']
  %s0 = inlined_call_operand.vmem [shape: f32[32,16], index: 0, kind: input, shape index: {}]
  %s1 = inlined_call_operand.hbm [shape: f32[2,16,512], index: 1, kind: input, shape index: {}]
  %s2 = inlined_call_operand.hbm [shape: f32[2,32,512], index: 2, kind: output, shape index: {}]
  %s3 = sld [smem:[#allocation0]]
  $region45: #{tpu_custom_call.1} parent=0
    _
  %s5 = ssub.s32 1, %s3
  %s6 = scalar_select 0, %s5, %s3
  $region1: #{tpu_custom_call.1} parent=0
    #allocation2 [shape = 'u8[65536]{0}', space=vmem, size = 0x10000, scoped, tag = 'input window, operand 1']
    #allocation3 [shape = 's32[2]{0}', space=sflag, size = 0x8, scoped, tag = 'scoped memory for tpu_custom_call.1']
    #allocation4 [shape = 's32[2]{0}', space=sflag, size = 0x8, scoped, tag = 'scoped memory for tpu_custom_call.1']
    #allocation5 [shape = 'u8[131072]{0}', space=vmem, size = 0x20000, scoped, tag = 'output window, operand 0']
    %7 = vsyncpa [#allocation3], 0
    %s8 = scalar_lea.sflag [#allocation3], 1
    %9 = vsyncpa %s8, 0
    %10 = vsyncpa [#allocation4], 0
    %s11 = scalar_lea.sflag [#allocation4], 1
    %12 = vsyncpa %s11, 0
    loop: start=0, step=1, limit=4
    $region2: #{tpu_custom_call.1} parent=1 // loop_pre_header
      _
    $region3: #{tpu_custom_call.1} parent=1 // loop_header
      %s14 = sphi 0, %s18
      %p15 = scmp.ge.s32.totalorder %s14, 4
      %s22 = sphi 0, %s22
      %s24 = sphi 0, %s22
      %s25 = sphi 0, %s24
      %s39 = sphi 0, %s25
      %s45 = sphi 0, %s47
      %s48 = sphi 0, %s45
      %s49 = sphi 0, %s48
      %s65 = sphi 0, %s49
      %s71 = sphi 0, %s73
      %s74 = sphi 0, %s71
      %s75 = sphi 0, %s74
      %s91 = sphi 0, %s75
    $region4: #{tpu_custom_call.1} parent=1 // loop_header_branch
      %17 = sbr.rel (%p15) target = $region8
    $region5: #{tpu_custom_call.1} parent=1 // loop_body
      %s19 = ssub.s32 %s14, 1
      %s20 = ssub.s32 %s14, 2
      %s21 = sadd.s32 %s14, 1
      %s23 = sadd.s32 %s22, 1
      %p26 = scmp.eq.s32.totalorder %s14, 1
      %p27 = scmp.ne.s32.totalorder %s22, %s24
      %p28 = scmp.eq.s32.totalorder %s14, 0
      %p29 = por %p27, %p28
      %p30 = scmp.ne.s32.totalorder %s22, %s24
      %p31 = scmp.eq.s32.totalorder %s19, 1
      %p32 = por %p30, %p31
      %p33 = scmp.ne.s32.totalorder %s24, %s25
      %p34 = scmp.eq.s32.totalorder %s19, 0
      %p35 = por %p33, %p34
      %p36 = scmp.ne.s32.totalorder %s24, %s25
      %p37 = scmp.eq.s32.totalorder %s20, 1
      %p38 = por %p36, %p37
      %p40 = scmp.ne.s32.totalorder %s25, %s39
      %p41 = scmp.eq.s32.totalorder %s20, 0
      %p42 = por %p40, %p41
      %s43 = ssub.s32 %s14, %s21
      %p44 = scmp.eq.s32.totalorder %s43, 0
      %s46 = sadd.s32 %s45, 1
      %s47 = scalar_select %p44, %s45, %s46
      %p50 = pneg %p44
      %p51 = scmp.eq.s32.totalorder %s14, 1
      %p52 = por %p50, %p51
      %p53 = scmp.ne.s32.totalorder %s45, %s48
      %p54 = scmp.eq.s32.totalorder %s14, 0
      %p55 = por %p53, %p54
      %p56 = scmp.ne.s32.totalorder %s45, %s48
      %p57 = scmp.eq.s32.totalorder %s19, 1
      %p58 = por %p56, %p57
      %p59 = scmp.ne.s32.totalorder %s48, %s49
      %p60 = scmp.eq.s32.totalorder %s19, 0
      %p61 = por %p59, %p60
      %p62 = scmp.ne.s32.totalorder %s48, %s49
      %p63 = scmp.eq.s32.totalorder %s20, 1
      %p64 = por %p62, %p63
      %p66 = scmp.ne.s32.totalorder %s49, %s65
      %p67 = scmp.eq.s32.totalorder %s20, 0
      %p68 = por %p66, %p67
      %s69 = ssub.s32 %s14, %s21
      %p70 = scmp.eq.s32.totalorder %s69, 0
      %s72 = sadd.s32 %s71, 1
      %s73 = scalar_select %p70, %s71, %s72
      %p76 = pneg %p70
      %p77 = scmp.eq.s32.totalorder %s14, 1
      %p78 = por %p76, %p77
      %p79 = scmp.ne.s32.totalorder %s71, %s74
      %p80 = scmp.eq.s32.totalorder %s14, 0
      %p81 = por %p79, %p80
      %p82 = scmp.ne.s32.totalorder %s71, %s74
      %p83 = scmp.eq.s32.totalorder %s19, 1
      %p84 = por %p82, %p83
      %p85 = scmp.ne.s32.totalorder %s74, %s75
      %p86 = scmp.eq.s32.totalorder %s19, 0
      %p87 = por %p85, %p86
      %p88 = scmp.ne.s32.totalorder %s74, %s75
      %p89 = scmp.eq.s32.totalorder %s20, 1
      %p90 = por %p88, %p89
      %p92 = scmp.ne.s32.totalorder %s75, %s91
      %p93 = scmp.eq.s32.totalorder %s20, 0
      %p94 = por %p92, %p93
      %p95 = scmp.le.s32.totalorder 1, %s14
      %p96 = scmp.lt.s32.totalorder %s14, 3
      %p97 = pnand %p95, %p96
      %p98 = pneg %p97
      // Predicated region
      $region9: #{tpu_custom_call.1} parent=5 // pred_check
        _
      $region10: #{tpu_custom_call.1} parent=5 // pred_check_branch
        %100 = sbr.rel (%p97) target = $region12
      $region11: #{tpu_custom_call.1} parent=5 // pred_region
        %s101 = ssub.s32 %s14, 1
        // Predicated region
        $region13: #{tpu_custom_call.1} parent=11 // pred_check
          %p102 = pneg %p35
        $region14: #{tpu_custom_call.1} parent=11 // pred_check_branch
          %104 = sbr.rel (%p102) target = $region16
        $region15: #{tpu_custom_call.1} parent=11 // pred_region
          _
        $region16: #{tpu_custom_call.1} parent=11 // pred_fallthru
          _
      $region12: #{tpu_custom_call.1} parent=5 // pred_fallthru
        _
      %p105 = scmp.lt.s32.totalorder %s14, 2
      // Predicated region
      $region17: #{tpu_custom_call.1} parent=5 // pred_check
        %p106 = pneg %p105
      $region18: #{tpu_custom_call.1} parent=5 // pred_check_branch
        %108 = sbr.rel (%p106) target = $region20
      $region19: #{tpu_custom_call.1} parent=5 // pred_region
        // Predicated region
        $region21: #{tpu_custom_call.1} parent=19 // pred_check
          %p109 = pneg %p55
        $region22: #{tpu_custom_call.1} parent=19 // pred_check_branch
          %111 = sbr.rel (%p109) target = $region24
        $region23: #{tpu_custom_call.1} parent=19 // pred_region
          %s112 = sand.u32 %s45, 1
          %s113 = scalar_lea.sflag [#allocation3], %s112
          %s114 = sand.u32 %s45, 1
          %s115 = smul.addr %s114, 64
          %s116 = scalar_lea.vmem [#allocation2], %s115
          %s118 = ssub.s32 1024, 1024
          %119 = vsyncadd %s113, %s118
          %s120 = smul.addr %s14, 8
          %s121 = smul.addr %s120, 128
          %s122 = scalar_lea.hbm %s1, %s121
          %s123 = sshll.u32 %s116, 4
          %s124 = int_to_ptr.vmem [resolvable:$true] %s123
          %129 = dma.hbm_to_vmem [thread:$0]  %s122, 1024, %s124, %s113, 512, 512, 32
        $region24: #{tpu_custom_call.1} parent=19 // pred_fallthru
          _
      $region20: #{tpu_custom_call.1} parent=5 // pred_fallthru
        _
      %p130 = scmp.le.s32.totalorder 1, %s14
      %p131 = scmp.lt.s32.totalorder %s14, 3
      %p132 = pnand %p130, %p131
      %p133 = pneg %p132
      // Predicated region
      $region25: #{tpu_custom_call.1} parent=5 // pred_check
        _
      $region26: #{tpu_custom_call.1} parent=5 // pred_check_branch
        %135 = sbr.rel (%p132) target = $region28
      $region27: #{tpu_custom_call.1} parent=5 // pred_region
        %s136 = ssub.s32 %s14, 1
        %s137 = sand.u32 %s48, 1
        %s138 = scalar_lea.sflag [#allocation3], %s137
        %s139 = sand.u32 %s48, 1
        %s140 = smul.addr %s139, 64
        %s141 = scalar_lea.vmem [#allocation2], %s140
        // Predicated region
        $region29: #{tpu_custom_call.1} parent=27 // pred_check
          %p142 = pneg %p61
        $region30: #{tpu_custom_call.1} parent=27 // pred_check_branch
          %144 = sbr.rel (%p142) target = $region32
        $region31: #{tpu_custom_call.1} parent=27 // pred_region
          %145 = dma.done %s138, 1024
        $region32: #{tpu_custom_call.1} parent=27 // pred_fallthru
          _
        %p146 = pneg %p35
        %p147 = pneg %p32
        %s148 = sand.u32 %s48, 1
        %s149 = scalar_lea.sflag [#allocation3], %s148
        %s150 = sand.u32 %s48, 1
        %s151 = smul.addr %s150, 64
        %s152 = scalar_lea.vmem [#allocation2], %s151
        %p153 = pneg %p61
        %p154 = pneg %p58
        %p155 = pneg %p87
        %p156 = pneg %p84
        %s157 = sand.u32 %s74, 1
        %s158 = scalar_lea.sflag [#allocation4], %s157
        %s159 = sand.u32 %s74, 1
        %s160 = smul.addr %s159, 128
        %s161 = scalar_lea.vmem [#allocation5], %s160
        %v162 = vld [vmem:[%s0] sm:$0xff]
        %v163 = vld [vmem:[%s0 + $0x8] sm:$0xff]
        %v164 = vld [vmem:[%s0 + $0x10] sm:$0xff]
        %v165 = vld [vmem:[%s0 + $0x18] sm:$0xff]
        %v166 = vld [vmem:[%s141] sm:$0xff]
        %v167 = vld [vmem:[%s141 + $0x8] sm:$0xff]
        %v168 = vld [vmem:[%s141 + $0x10] sm:$0xff]
        %v169 = vld [vmem:[%s141 + $0x18] sm:$0xff]
        %v170 = vld [vmem:[%s141 + $0x20] sm:$0xff]
        %v171 = vld [vmem:[%s141 + $0x28] sm:$0xff]
        %v172 = vld [vmem:[%s141 + $0x30] sm:$0xff]
        %v173 = vld [vmem:[%s141 + $0x38] sm:$0xff]
        %vm174 = vcmask 130048
        %v176 = vsel %vm174, %v162, 0
        %v179 = vsel %vm174, %v163, 0
        %v182 = vsel %vm174, %v164, 0
        %v185 = vsel %vm174, %v165, 0
        %187 = vmatprep.subr.mxu0 %v167
        %188 = vmatpush1.msra.mxu0 %v166
        %189 = vmatprep.subr.mxu0 %v171
        %190 = vmatpush1.msra.mxu0 %v170
        %191 = vmatprep.subr.mxu0 0.0
        %192 = vmatpush1.msra.mxu0 0.0
        %193 = vmatprep.subr.mxu0 0.0
        %194 = vmatpush1.msra.mxu0 0.0
        %195 = vmatprep.subr.mxu0 0.0
        %196 = vmatpush1.msra.mxu0 0.0
        %197 = vmatprep.subr.mxu0 0.0
        %198 = vmatpush1.msra.mxu0 0.0
        %199 = vmatprep.subr.mxu0 0.0
        %200 = vmatpush1.msra.mxu0 0.0
        %201 = vmatprep.subr.mxu0 0.0
        %202 = vmatpush1.msra.mxu0 0.0
        %203 = vmatprep.subr.mxu0 0.0
        %204 = vmatpush1.msra.mxu0 0.0
        %205 = vmatprep.subr.mxu0 0.0
        %206 = vmatpush1.msra.mxu0 0.0
        %207 = vmatprep.subr.mxu0 0.0
        %208 = vmatpush1.msra.mxu0 0.0
        %209 = vmatprep.subr.mxu0 0.0
        %210 = vmatpush1.msra.mxu0 0.0
        %211 = vmatprep.subr.mxu0 0.0
        %212 = vmatpush1.msra.mxu0 0.0
        %213 = vmatprep.subr.mxu0 0.0
        %214 = vmatpush1.msra.mxu0 0.0
        %215 = vmatprep.subr.mxu0 0.0
        %216 = vmatpush1.msra.mxu0 0.0
        %217 = vmatprep.subr.mxu0 0.0
        %218 = vmatpush1.msra.mxu0 0.0
        %219 = vmatprep.subr.mxu0 0.0
        %220 = vmatpush1.msra.mxu0 0.0
        %221 = vmatprep.subr.mxu0 0.0
        %222 = vmatpush1.msra.mxu0 0.0
        %223 = vmatprep.subr.mxu0 0.0
        %224 = vmatpush1.msra.mxu0 0.0
        %225 = vmatprep.subr.mxu0 0.0
        %226 = vmatpush1.msra.mxu0 0.0
        %227 = vmatprep.subr.mxu0 0.0
        %228 = vmatpush1.msra.mxu0 0.0
        %229 = vmatprep.subr.mxu0 0.0
        %230 = vmatpush1.msra.mxu0 0.0
        %231 = vmatprep.subr.mxu0 0.0
        %232 = vmatpush1.msra.mxu0 0.0
        %233 = vmatprep.subr.mxu0 0.0
        %234 = vmatpush1.msra.mxu0 0.0
        %235 = vmatprep.subr.mxu0 0.0
        %236 = vmatpush1.msra.mxu0 0.0
        %237 = vmatprep.subr.mxu0 0.0
        %238 = vmatpush1.msra.mxu0 0.0
        %239 = vmatprep.subr.mxu0 0.0
        %240 = vmatpush1.msra.mxu0 0.0
        %241 = vmatprep.subr.mxu0 0.0
        %242 = vmatpush1.msra.mxu0 0.0
        %243 = vmatprep.subr.mxu0 0.0
        %244 = vmatpush1.msra.mxu0 0.0
        %245 = vmatprep.subr.mxu0 0.0
        %246 = vmatpush1.msra.mxu0 0.0
        %247 = vmatprep.subr.mxu0 0.0
        %248 = vmatpush1.msra.mxu0 0.0
        %249 = vmatprep.subr.mxu0 0.0
        %250 = vmatpush1.msra.mxu0 0.0
        %251 = vmatprep.mubr.f32.mxu0 0.0
        %252 = vmatmul.mubr.f32.gmra.mrb[0].mxu0 %v176
        %v253 = vpop.f32.mrb[0].mxu0
        %v254 = vadd.f32 0.0, %v253
        %v255 = vpop.f32.mrb[0].mxu0
        %v256 = vadd.f32 0.0, %v255
        %257 = vmatprep.mubr.f32.mxu0 0.0
        %258 = vmatmul.mubr.f32.gmra.mrb[0].mxu0 %v179
        %v259 = vpop.f32.mrb[0].mxu0
        %v260 = vadd.f32 0.0, %v259
        %v261 = vpop.f32.mrb[0].mxu0
        %v262 = vadd.f32 0.0, %v261
        %263 = vmatprep.mubr.f32.mxu0 0.0
        %264 = vmatmul.mubr.f32.gmra.mrb[0].mxu0 %v182
        %v265 = vpop.f32.mrb[0].mxu0
        %v266 = vadd.f32 0.0, %v265
        %v267 = vpop.f32.mrb[0].mxu0
        %v268 = vadd.f32 0.0, %v267
        %269 = vmatprep.mubr.f32.mxu0 0.0
        %270 = vmatmul.mubr.f32.gmra.mrb[0].mxu0 %v185
        %v271 = vpop.f32.mrb[0].mxu0
        %v272 = vadd.f32 0.0, %v271
        %v273 = vpop.f32.mrb[0].mxu0
        %v274 = vadd.f32 0.0, %v273
        %275 = vdwg.mxu0
        %276 = vmatprep.subr.mxu0 %v169
        %277 = vmatpush1.msra.mxu0 %v168
        %278 = vmatprep.subr.mxu0 %v173
        %279 = vmatpush1.msra.mxu0 %v172
        %280 = vmatprep.subr.mxu0 0.0
        %281 = vmatpush1.msra.mxu0 0.0
        %282 = vmatprep.subr.mxu0 0.0
        %283 = vmatpush1.msra.mxu0 0.0
        %284 = vmatprep.subr.mxu0 0.0
        %285 = vmatpush1.msra.mxu0 0.0
        %286 = vmatprep.subr.mxu0 0.0
        %287 = vmatpush1.msra.mxu0 0.0
        %288 = vmatprep.subr.mxu0 0.0
        %289 = vmatpush1.msra.mxu0 0.0
        %290 = vmatprep.subr.mxu0 0.0
        %291 = vmatpush1.msra.mxu0 0.0
        %292 = vmatprep.subr.mxu0 0.0
        %293 = vmatpush1.msra.mxu0 0.0
        %294 = vmatprep.subr.mxu0 0.0
        %295 = vmatpush1.msra.mxu0 0.0
        %296 = vmatprep.subr.mxu0 0.0
        %297 = vmatpush1.msra.mxu0 0.0
        %298 = vmatprep.subr.mxu0 0.0
        %299 = vmatpush1.msra.mxu0 0.0
        %300 = vmatprep.subr.mxu0 0.0
        %301 = vmatpush1.msra.mxu0 0.0
        %302 = vmatprep.subr.mxu0 0.0
        %303 = vmatpush1.msra.mxu0 0.0
        %304 = vmatprep.subr.mxu0 0.0
        %305 = vmatpush1.msra.mxu0 0.0
        %306 = vmatprep.subr.mxu0 0.0
        %307 = vmatpush1.msra.mxu0 0.0
        %308 = vmatprep.subr.mxu0 0.0
        %309 = vmatpush1.msra.mxu0 0.0
        %310 = vmatprep.subr.mxu0 0.0
        %311 = vmatpush1.msra.mxu0 0.0
        %312 = vmatprep.subr.mxu0 0.0
        %313 = vmatpush1.msra.mxu0 0.0
        %314 = vmatprep.subr.mxu0 0.0
        %315 = vmatpush1.msra.mxu0 0.0
        %316 = vmatprep.subr.mxu0 0.0
        %317 = vmatpush1.msra.mxu0 0.0
        %318 = vmatprep.subr.mxu0 0.0
        %319 = vmatpush1.msra.mxu0 0.0
        %320 = vmatprep.subr.mxu0 0.0
        %321 = vmatpush1.msra.mxu0 0.0
        %322 = vmatprep.subr.mxu0 0.0
        %323 = vmatpush1.msra.mxu0 0.0
        %324 = vmatprep.subr.mxu0 0.0
        %325 = vmatpush1.msra.mxu0 0.0
        %326 = vmatprep.subr.mxu0 0.0
        %327 = vmatpush1.msra.mxu0 0.0
        %328 = vmatprep.subr.mxu0 0.0
        %329 = vmatpush1.msra.mxu0 0.0
        %330 = vmatprep.subr.mxu0 0.0
        %331 = vmatpush1.msra.mxu0 0.0
        %332 = vmatprep.subr.mxu0 0.0
        %333 = vmatpush1.msra.mxu0 0.0
        %334 = vmatprep.subr.mxu0 0.0
        %335 = vmatpush1.msra.mxu0 0.0
        %336 = vmatprep.subr.mxu0 0.0
        %337 = vmatpush1.msra.mxu0 0.0
        %338 = vmatprep.subr.mxu0 0.0
        %339 = vmatpush1.msra.mxu0 0.0
        %340 = vmatprep.mubr.f32.mxu0 0.0
        %341 = vmatmul.mubr.f32.gmra.mrb[0].mxu0 %v176
        %v342 = vpop.f32.mrb[0].mxu0
        %v343 = vadd.f32 0.0, %v342
        %v344 = vpop.f32.mrb[0].mxu0
        %v345 = vadd.f32 0.0, %v344
        %346 = vmatprep.mubr.f32.mxu0 0.0
        %347 = vmatmul.mubr.f32.gmra.mrb[0].mxu0 %v179
        %v348 = vpop.f32.mrb[0].mxu0
        %v349 = vadd.f32 0.0, %v348
        %v350 = vpop.f32.mrb[0].mxu0
        %v351 = vadd.f32 0.0, %v350
        %352 = vmatprep.mubr.f32.mxu0 0.0
        %353 = vmatmul.mubr.f32.gmra.mrb[0].mxu0 %v182
        %v354 = vpop.f32.mrb[0].mxu0
        %v355 = vadd.f32 0.0, %v354
        %v356 = vpop.f32.mrb[0].mxu0
        %v357 = vadd.f32 0.0, %v356
        %358 = vmatprep.mubr.f32.mxu0 0.0
        %359 = vmatmul.mubr.f32.gmra.mrb[0].mxu0 %v185
        %v360 = vpop.f32.mrb[0].mxu0
        %v361 = vadd.f32 0.0, %v360
        %v362 = vpop.f32.mrb[0].mxu0
        %v363 = vadd.f32 0.0, %v362
        %364 = vdwg.mxu0
        %365 = vst [vmem:[%s161] sm:$0xff] %v254
        %366 = vst [vmem:[%s161 + $0x8] sm:$0xff] %v256
        %367 = vst [vmem:[%s161 + $0x10] sm:$0xff] %v343
        %368 = vst [vmem:[%s161 + $0x18] sm:$0xff] %v345
        %369 = vst [vmem:[%s161 + $0x20] sm:$0xff] %v260
        %370 = vst [vmem:[%s161 + $0x28] sm:$0xff] %v262
        %371 = vst [vmem:[%s161 + $0x30] sm:$0xff] %v349
        %372 = vst [vmem:[%s161 + $0x38] sm:$0xff] %v351
        %373 = vst [vmem:[%s161 + $0x40] sm:$0xff] %v266
        %374 = vst [vmem:[%s161 + $0x48] sm:$0xff] %v268
        %375 = vst [vmem:[%s161 + $0x50] sm:$0xff] %v355
        %376 = vst [vmem:[%s161 + $0x58] sm:$0xff] %v357
        %377 = vst [vmem:[%s161 + $0x60] sm:$0xff] %v272
        %378 = vst [vmem:[%s161 + $0x68] sm:$0xff] %v274
        %379 = vst [vmem:[%s161 + $0x70] sm:$0xff] %v361
        %380 = vst [vmem:[%s161 + $0x78] sm:$0xff] %v363
        %s381 = sand.u32 %s74, 1
        %s382 = scalar_lea.sflag [#allocation4], %s381
        %s383 = sand.u32 %s74, 1
        %s384 = smul.addr %s383, 128
        %s385 = scalar_lea.vmem [#allocation5], %s384
        // Predicated region
        $region33: #{tpu_custom_call.1} parent=27 // pred_check
          %p386 = pneg %p84
        $region34: #{tpu_custom_call.1} parent=27 // pred_check_branch
          %388 = sbr.rel (%p386) target = $region36
        $region35: #{tpu_custom_call.1} parent=27 // pred_region
          %s390 = ssub.s32 2048, 2048
          %391 = vsyncadd %s382, %s390
          %s392 = smul.addr %s19, 16
          %s393 = smul.addr %s392, 128
          %s394 = scalar_lea.hbm %s2, %s393
          %s395 = sshll.u32 %s385, 4
          %s396 = int_to_ptr.vmem [resolvable:$true] %s395
          %401 = dma.vmem_to_hbm [thread:$0]  %s396, 2048, %s394, %s382, 512, 512, 32
        $region36: #{tpu_custom_call.1} parent=27 // pred_fallthru
          _
      $region28: #{tpu_custom_call.1} parent=5 // pred_fallthru
        _
      %p402 = scmp.le.s32.totalorder 2, %s14
      // Predicated region
      $region37: #{tpu_custom_call.1} parent=5 // pred_check
        %p403 = pneg %p402
      $region38: #{tpu_custom_call.1} parent=5 // pred_check_branch
        %405 = sbr.rel (%p403) target = $region40
      $region39: #{tpu_custom_call.1} parent=5 // pred_region
        %s406 = ssub.s32 %s14, 2
        // Predicated region
        $region41: #{tpu_custom_call.1} parent=39 // pred_check
          %p407 = pneg %p90
        $region42: #{tpu_custom_call.1} parent=39 // pred_check_branch
          %409 = sbr.rel (%p407) target = $region44
        $region43: #{tpu_custom_call.1} parent=39 // pred_region
          %s410 = sand.u32 %s75, 1
          %s411 = scalar_lea.sflag [#allocation4], %s410
          %s412 = sand.u32 %s75, 1
          %s413 = smul.addr %s412, 128
          %s414 = scalar_lea.vmem [#allocation5], %s413
          %415 = dma.done %s411, 2048
        $region44: #{tpu_custom_call.1} parent=39 // pred_fallthru
          _
      $region40: #{tpu_custom_call.1} parent=5 // pred_fallthru
        _
    $region6: #{tpu_custom_call.1} parent=1 // loop_footer
      %s18 = sadd.s32 1, %s14
    $region7: #{tpu_custom_call.1} parent=1 // loop_footer_branch
      %13 = sbr.rel target = $region3
    $region8: #{tpu_custom_call.1} parent=1 // loop_exit
      _
    %416 = vsyncpa [#allocation3], 1
    %s417 = scalar_lea.sflag [#allocation3], 1
    %418 = vsyncpa %s417, 1
    %419 = vsyncpa [#allocation4], 1
    %s420 = scalar_lea.sflag [#allocation4], 1
    %421 = vsyncpa %s420, 1

</llo_original>
